<compile_context>
chip_gen: v7x
topology: tpu7x:2x2x1
jax: 0.10.0
libtpu: 0.0.40
codegen_flags: <defaults>
</compile_context>

<pallas_src>
import jax
import jax.numpy as jnp
from jax.experimental import pallas as pl

H = 64
W = 64
C = 3
SCALE = 16          # F.interpolate(scale_factor=16) and size=64 downsample
PH = H * SCALE      # 1024  (param spatial dims)
PW = W * SCALE      # 1024

# Lane-dense slab covering the whole problem: 64*64*3 = 12288 = 96 * 128.
ROWS = 96
COLS = 128


def _mul_clamp_kernel(x_ref, p_ref, o_ref):
    # Single (96, 128) VMEM block per operand — full-width, unmasked loads/stores.
    o_ref[...] = jnp.clip(x_ref[...] * p_ref[...], 0.0, 1.0)


def prepare_param(param):
    """One-time weight preprocessing (run at parameter-setup time, not per call).

    The composition of nearest-up(x16) and nearest-down(size=64) is a pure
    stride-16 subsample of `param`.  We precompute that 48 KB subsample,
    permute it into the input's native HWC order, and flatten it to the
    lane-dense (96, 128) slab the kernel consumes.
    """
    p_sub_chw = param[0, :, ::SCALE, ::SCALE]          # (C, H, W)  — 48 KB
    p_sub_hwc = jnp.transpose(p_sub_chw, (1, 2, 0))    # (H, W, C)  — match x layout
    return p_sub_hwc.reshape(ROWS, COLS)               # (96, 128)


def net_forward(x_hwc, p_flat):
    """Per-call forward.

    x_hwc  : (H, W, C)    float32   — input, native HWC layout
    p_flat : (ROWS, COLS) float32   — output of prepare_param (fixed weight)
    returns (H, W, C) float32
    """
    # Pure reshape (same row-major bytes) — no transpose in the hot path.
    x_flat = x_hwc.reshape(ROWS, COLS)

    out_flat = pl.pallas_call(
        _mul_clamp_kernel,
        out_shape=jax.ShapeDtypeStruct((ROWS, COLS), x_hwc.dtype),
        in_specs=[
            pl.BlockSpec((ROWS, COLS), lambda: (0, 0)),
            pl.BlockSpec((ROWS, COLS), lambda: (0, 0)),
        ],
        out_specs=pl.BlockSpec((ROWS, COLS), lambda: (0, 0)),
        # Output reuses the (reshaped) input buffer; shapes/dtypes match.
        input_output_aliases={0: 0},
    )(x_flat, p_flat)

    return out_flat.reshape(H, W, C)


def _reference(x_hwc, param):
    """Pure-JAX transcription of the PyTorch forward (for verification)."""
    x = jnp.transpose(x_hwc, (2, 0, 1))[None]                       # (1,C,H,W)
    up = jnp.repeat(jnp.repeat(x, SCALE, axis=2), SCALE, axis=3)    # nearest up x16
    y = jnp.clip(up * param, 0.0, 1.0)
    down = y[:, :, ::SCALE, ::SCALE]                                # nearest down to 64
    return jnp.transpose(down[0], (1, 2, 0))


if __name__ == "__main__":
    key = jax.random.PRNGKey(0)
    k_param, k_x = jax.random.split(key)

    # nn.Parameter(torch.rand((1, 3, 1024, 1024)) * 0.2) -> deterministic init.
    param = jax.random.uniform(k_param, (1, C, PH, PW), dtype=jnp.float32) * 0.2
    # Input implied by the forward: (64, 64, 3) HWC float32.
    x = jax.random.uniform(k_x, (H, W, C), dtype=jnp.float32)

    # One-time parameter preprocessing (kept out of the per-call path).
    p_flat = jax.block_until_ready(prepare_param(param))

    fwd = jax.jit(net_forward)
    out = jax.block_until_ready(fwd(x, p_flat))

    ref = jax.block_until_ready(_reference(x, param))
    assert out.shape == (H, W, C) and out.dtype == jnp.float32
    assert jnp.allclose(out, ref), "Pallas kernel does not match reference"

    print("KERNEL_OK")
</pallas_src>

<mosaic_0001>
module attributes {stable_mosaic.version = 11 : i64} {
  func.func @_mul_clamp_kernel(%arg0: memref<96x128xf32, #tpu.memory_space<vmem>>, %arg1: memref<96x128xf32, #tpu.memory_space<vmem>>, %arg2: memref<96x128xf32, #tpu.memory_space<vmem>>) attributes {dimension_semantics = [], scalar_prefetch = 0 : i64, scratch_operands = 0 : i64, tpu.core_type = #tpu.core_type<tc>} {
    %c0 = arith.constant 0 : index
    %c0_0 = arith.constant 0 : index
    %0 = vector.load %arg0[%c0, %c0_0] : memref<96x128xf32, #tpu.memory_space<vmem>>, vector<96x128xf32>
    %c0_1 = arith.constant 0 : index
    %c0_2 = arith.constant 0 : index
    %1 = vector.load %arg1[%c0_1, %c0_2] : memref<96x128xf32, #tpu.memory_space<vmem>>, vector<96x128xf32>
    %2 = arith.mulf %0, %1 : vector<96x128xf32>
    %cst = arith.constant 0.000000e+00 : f32
    %cst_3 = arith.constant 1.000000e+00 : f32
    %3 = vector.broadcast %cst : f32 to vector<96x128xf32>
    %4 = arith.maximumf %3, %2 : vector<96x128xf32>
    %5 = vector.broadcast %cst_3 : f32 to vector<96x128xf32>
    %6 = arith.minimumf %5, %4 : vector<96x128xf32>
    %c0_4 = arith.constant 0 : index
    %c0_5 = arith.constant 0 : index
    %7 = vector.load %arg2[%c0_4, %c0_5] : memref<96x128xf32, #tpu.memory_space<vmem>>, vector<96x128xf32>
    tpu.vector_store %arg2[%c0_4, %c0_5], %6 {strides = array<i32>} : memref<96x128xf32, #tpu.memory_space<vmem>>, vector<96x128xf32>,
    return
  }
}

</mosaic_0001>

<llo_original>
// kernel: net_forward.1
$region0: #{net_forward.1}
  #allocation0 [shape = 'u32[]', space=smem, size = 0x4, offset = 0x4, fixed_abs, tag = 'smem constant byte address 0x4 - core index']
  #allocation1 [shape = 'u32[144,128]{1,0:T(1,128)}', space=vmem, size = 0x12000, scoped, tag = 'internal scratch']
  %s0 = inlined_call_operand.vmem [shape: f32[96,128], index: 0, kind: input, shape index: {}, may-alias: {0,2}]
  %s1 = inlined_call_operand.vmem [shape: f32[96,128], index: 1, kind: input, shape index: {}]
  %s2 = inlined_call_operand.vmem [shape: f32[96,128], index: 2, kind: output, shape index: {}, may-alias: {0,2}]
  %s3 = sld [smem:[#allocation0]]
  $region18: #{net_forward.1} parent=0
    _
  %s5 = ssub.s32 1, %s3
  %s6 = scalar_select 0, %s5, %s3
  // Predicated region
  $region2: #{net_forward.1} parent=0 // pred_check
    _
  $region3: #{net_forward.1} parent=0 // pred_check_branch
    %8 = sbr.rel (0) target = $region5
  $region4: #{net_forward.1} parent=0 // pred_region
    _
  $region5: #{net_forward.1} parent=0 // pred_fallthru
    _
  // Predicated region
  $region6: #{net_forward.1} parent=0 // pred_check
    _
  $region7: #{net_forward.1} parent=0 // pred_check_branch
    %10 = sbr.rel (0) target = $region9
  $region8: #{net_forward.1} parent=0 // pred_region
    _
  $region9: #{net_forward.1} parent=0 // pred_fallthru
    _
  %v11 = vld [vmem:[%s0] sm:$0xff]
  %v12 = vld [vmem:[%s0 + $0x8] sm:$0xff]
  %v13 = vld [vmem:[%s0 + $0x10] sm:$0xff]
  %v14 = vld [vmem:[%s0 + $0x18] sm:$0xff]
  %v15 = vld [vmem:[%s0 + $0x20] sm:$0xff]
  %v16 = vld [vmem:[%s0 + $0x28] sm:$0xff]
  %v17 = vld [vmem:[%s0 + $0x30] sm:$0xff]
  %v18 = vld [vmem:[%s0 + $0x38] sm:$0xff]
  %v19 = vld [vmem:[%s0 + $0x40] sm:$0xff]
  %v20 = vld [vmem:[%s0 + $0x48] sm:$0xff]
  %v21 = vld [vmem:[%s0 + $0x50] sm:$0xff]
  %v22 = vld [vmem:[%s0 + $0x58] sm:$0xff]
  %v23 = vld [vmem:[%s1] sm:$0xff]
  %v24 = vld [vmem:[%s1 + $0x8] sm:$0xff]
  %v25 = vld [vmem:[%s1 + $0x10] sm:$0xff]
  %v26 = vld [vmem:[%s1 + $0x18] sm:$0xff]
  %v27 = vld [vmem:[%s1 + $0x20] sm:$0xff]
  %v28 = vld [vmem:[%s1 + $0x28] sm:$0xff]
  %v29 = vld [vmem:[%s1 + $0x30] sm:$0xff]
  %v30 = vld [vmem:[%s1 + $0x38] sm:$0xff]
  %v31 = vld [vmem:[%s1 + $0x40] sm:$0xff]
  %v32 = vld [vmem:[%s1 + $0x48] sm:$0xff]
  %v33 = vld [vmem:[%s1 + $0x50] sm:$0xff]
  %v34 = vld [vmem:[%s1 + $0x58] sm:$0xff]
  %v35 = vmul.f32 %v11, %v23
  %v36 = vmul.f32 %v12, %v24
  %v37 = vmul.f32 %v13, %v25
  %v38 = vmul.f32 %v14, %v26
  %v39 = vmul.f32 %v15, %v27
  %v40 = vmul.f32 %v16, %v28
  %v41 = vmul.f32 %v17, %v29
  %v42 = vmul.f32 %v18, %v30
  %v43 = vmul.f32 %v19, %v31
  %v44 = vmul.f32 %v20, %v32
  %v45 = vmul.f32 %v21, %v33
  %v46 = vmul.f32 %v22, %v34
  %v47 = vmax.f32 %v35, 0.0
  %v48 = vmax.f32 %v36, 0.0
  %v49 = vmax.f32 %v37, 0.0
  %v50 = vmax.f32 %v38, 0.0
  %v51 = vmax.f32 %v39, 0.0
  %v52 = vmax.f32 %v40, 0.0
  %v53 = vmax.f32 %v41, 0.0
  %v54 = vmax.f32 %v42, 0.0
  %v55 = vmax.f32 %v43, 0.0
  %v56 = vmax.f32 %v44, 0.0
  %v57 = vmax.f32 %v45, 0.0
  %v58 = vmax.f32 %v46, 0.0
  %v59 = vmin.f32 %v47, 1.0
  %v60 = vmin.f32 %v48, 1.0
  %v61 = vmin.f32 %v49, 1.0
  %v62 = vmin.f32 %v50, 1.0
  %v63 = vmin.f32 %v51, 1.0
  %v64 = vmin.f32 %v52, 1.0
  %v65 = vmin.f32 %v53, 1.0
  %v66 = vmin.f32 %v54, 1.0
  %v67 = vmin.f32 %v55, 1.0
  %v68 = vmin.f32 %v56, 1.0
  %v69 = vmin.f32 %v57, 1.0
  %v70 = vmin.f32 %v58, 1.0
  %71 = vst [vmem:[%s2] sm:$0xff] %v59
  %72 = vst [vmem:[%s2 + $0x8] sm:$0xff] %v60
  %73 = vst [vmem:[%s2 + $0x10] sm:$0xff] %v61
  %74 = vst [vmem:[%s2 + $0x18] sm:$0xff] %v62
  %75 = vst [vmem:[%s2 + $0x20] sm:$0xff] %v63
  %76 = vst [vmem:[%s2 + $0x28] sm:$0xff] %v64
  %77 = vst [vmem:[%s2 + $0x30] sm:$0xff] %v65
  %78 = vst [vmem:[%s2 + $0x38] sm:$0xff] %v66
  %79 = vst [vmem:[%s2 + $0x40] sm:$0xff] %v67
  %80 = vst [vmem:[%s2 + $0x48] sm:$0xff] %v68
  %81 = vst [vmem:[%s2 + $0x50] sm:$0xff] %v69
  %82 = vst [vmem:[%s2 + $0x58] sm:$0xff] %v70
  // Predicated region
  $region10: #{net_forward.1} parent=0 // pred_check
    _
  $region11: #{net_forward.1} parent=0 // pred_check_branch
    %84 = sbr.rel (0) target = $region13
  $region12: #{net_forward.1} parent=0 // pred_region
    _
  $region13: #{net_forward.1} parent=0 // pred_fallthru
    _
  // Predicated region
  $region14: #{net_forward.1} parent=0 // pred_check
    _
  $region15: #{net_forward.1} parent=0 // pred_check_branch
    %86 = sbr.rel (0) target = $region17
  $region16: #{net_forward.1} parent=0 // pred_region
    _
  $region17: #{net_forward.1} parent=0 // pred_fallthru
    _

</llo_original>
